<compile_context>
chip_gen: v7x
topology: tpu7x:2x2x1
jax: 0.10.0
libtpu: 0.0.40
codegen_flags: <defaults>
</compile_context>

<pallas_src>
import functools

import jax
import jax.numpy as jnp
import numpy as np
from jax.experimental import pallas as pl
from jax.experimental.pallas import tpu as pltpu

NUM_CLASSES = 360
DECAY = 0.98
_LOG_DECAY = float(np.log(DECAY))


def _round_up(x, m):
    return ((x + m - 1) // m) * m


def _loss_kernel(logits_ref, tgt_ref, out_ref, *, valid_b):
    """One batch tile -> partial sum of per-sample losses for that tile."""
    logits = logits_ref[...].astype(jnp.float32)          # (TB, C)
    t = tgt_ref[...]                                       # (TB, 1) int32
    TB, C = logits.shape

    # a = |c - t| in [0, C-1]; ring distance d = min(a, C - a)
    c_idx = jax.lax.broadcasted_iota(jnp.int32, (TB, C), 1)
    a = jnp.abs(c_idx - t)                                 # (TB, C)
    dist = jnp.minimum(a, C - a).astype(jnp.float32)
    expected = jnp.exp(dist * jnp.float32(_LOG_DECAY))     # 0.98**dist (EUP)

    term = jnp.abs(expected - logits)
    term = jnp.where(a == 0, 1.0 - logits, term)           # target class: no abs
    term = jnp.where(a == C // 2, 0.0, term)               # antipodal class skipped

    # mask batch-padding rows so they contribute 0
    row = (pl.program_id(0) * TB
           + jax.lax.broadcasted_iota(jnp.int32, (TB, 1), 0))
    term = jnp.where(row < valid_b, term, 0.0)

    out_ref[...] = jnp.full((1, 1, 1), jnp.sum(term), jnp.float32)


def _loss_pallas(logits, targets, *, tile_b=512):
    B, C = logits.shape
    TB = min(int(tile_b), _round_up(B, 8))                 # sublane-aligned tile
    B_pad = _round_up(B, TB)
    num_tiles = B_pad // TB

    tgt2d = targets.astype(jnp.int32).reshape(B, 1)
    if B_pad != B:
        logits = jnp.pad(logits, ((0, B_pad - B), (0, 0)))
        tgt2d = jnp.pad(tgt2d, ((0, B_pad - B), (0, 0)))

    kernel = functools.partial(_loss_kernel, valid_b=B)
    partials = pl.pallas_call(
        kernel,
        out_shape=jax.ShapeDtypeStruct((num_tiles, 1, 1), jnp.float32),
        grid=(num_tiles,),
        in_specs=[
            pl.BlockSpec((TB, C), lambda i: (i, 0)),       # logits tile
            pl.BlockSpec((TB, 1), lambda i: (i, 0)),       # targets tile
        ],
        out_specs=pl.BlockSpec((1, 1, 1), lambda i: (i, 0, 0)),
        compiler_params=pltpu.CompilerParams(
            dimension_semantics=("parallel",)),
    )(logits, tgt2d)

    # tiny finalization on device: sum the per-tile partials, divide by true B
    return jnp.sum(partials) / jnp.float32(B)


_loss_pallas_jit = jax.jit(_loss_pallas, static_argnames=("tile_b",))


def custom_classification_loss(logits, targets, num_classes=NUM_CLASSES, alpha=18):
    """Mirrors CustomClassificationLoss.forward -> (loss, 0, loss).

    The third slot mirrors loss.item(); it is returned as a device scalar to
    avoid a per-step device->host sync — call float() on it only if a host
    Python float is truly required.
    """
    assert logits.shape[1] == num_classes == NUM_CLASSES
    loss = _loss_pallas_jit(logits, targets)
    return loss, 0, loss


def _reference_loss(logits, targets):
    """Pure-numpy transcription of the PyTorch double loop (for verification)."""
    logits = np.asarray(logits, dtype=np.float64)
    targets = np.asarray(targets)
    ce = 0.0
    for i in range(logits.shape[0]):
        wz = int(targets[i])
        kj = wz
        loss_one = 1.0 - logits[i][wz]
        for r in range(1, 180):
            wz -= 1
            if wz < 0:
                wz = 359
            loss_one += abs(DECAY ** r - logits[i][wz])
        for r in range(1, 180):
            kj += 1
            if kj > 359:
                kj = 0
            loss_one += abs(DECAY ** r - logits[i][kj])
        ce += loss_one
    return ce / targets.shape[0]


if __name__ == "__main__":
    key = jax.random.PRNGKey(0)
    k1, k2 = jax.random.split(key)

    B = 8
    # "logits" as the module consumes them (already softmax-like values in practice)
    logits = jax.nn.softmax(
        jax.random.normal(k1, (B, NUM_CLASSES), dtype=jnp.float32), axis=-1
    )
    targets = jax.random.randint(k2, (B,), 0, NUM_CLASSES, dtype=jnp.int32)

    loss, zero, loss_dev = custom_classification_loss(logits, targets)
    jax.block_until_ready(loss)

    loss_item = float(loss_dev)  # explicit host pull only for the test check
    ref = _reference_loss(np.asarray(logits), np.asarray(targets))
    assert np.isfinite(loss_item)
    assert abs(loss_item - ref) / max(abs(ref), 1e-6) < 1e-4, (loss_item, ref)

    print("KERNEL_OK")
</pallas_src>

<mosaic_0001>
module attributes {stable_mosaic.version = 11 : i64} {
  func.func @_loss_kernel(%arg0: i32, %arg1: memref<8x360xf32, #tpu.memory_space<vmem>>, %arg2: memref<8x1xi32, #tpu.memory_space<vmem>>, %arg3: memref<1x1x1xf32, #tpu.memory_space<vmem>>) attributes {dimension_semantics = [#tpu.dimension_semantics<parallel>], iteration_bounds = array<i64: 1>, scalar_prefetch = 0 : i64, scratch_operands = 0 : i64, tpu.core_type = #tpu.core_type<tc>, window_params = [{transform_indices = @transform_0, window_bounds = array<i64: 8, 360>}, {transform_indices = @transform_1, window_bounds = array<i64: 8, 1>}, {transform_indices = @transform_2, window_bounds = array<i64: 1, 1, 1>}]} {
    %c0 = arith.constant 0 : index
    %c0_0 = arith.constant 0 : index
    %0 = vector.load %arg1[%c0, %c0_0] : memref<8x360xf32, #tpu.memory_space<vmem>>, vector<8x360xf32>
    %c0_1 = arith.constant 0 : index
    %c0_2 = arith.constant 0 : index
    %1 = vector.load %arg2[%c0_1, %c0_2] : memref<8x1xi32, #tpu.memory_space<vmem>>, vector<8x1xi32>
    %2 = tpu.iota {dimensions = array<i32: 1>} : vector<8x360xi32>
    %3 = vector.broadcast %1 : vector<8x1xi32> to vector<8x360xi32>
    %4 = arith.subi %2, %3 : vector<8x360xi32>
    %5 = math.absi %4 : vector<8x360xi32>
    %c360_i32 = arith.constant 360 : i32
    %6 = vector.broadcast %c360_i32 : i32 to vector<8x360xi32>
    %7 = arith.subi %6, %5 : vector<8x360xi32>
    %8 = arith.minsi %5, %7 : vector<8x360xi32>
    %9 = arith.sitofp %8 : vector<8x360xi32> to vector<8x360xf32>
    %cst = arith.constant -0.0202027075 : f32
    %10 = vector.broadcast %cst : f32 to vector<8x360xf32>
    %11 = arith.mulf %9, %10 : vector<8x360xf32>
    %12 = math.exp %11 : vector<8x360xf32>
    %13 = arith.subf %12, %0 : vector<8x360xf32>
    %14 = math.absf %13 : vector<8x360xf32>
    %c0_i32 = arith.constant 0 : i32
    %15 = vector.broadcast %c0_i32 : i32 to vector<8x360xi32>
    %16 = arith.cmpi eq, %5, %15 : vector<8x360xi32>
    %cst_3 = arith.constant 1.000000e+00 : f32
    %17 = vector.broadcast %cst_3 : f32 to vector<8x360xf32>
    %18 = arith.subf %17, %0 : vector<8x360xf32>
    %19 = arith.select %16, %18, %14 : vector<8x360xi1>, vector<8x360xf32>
    %c180_i32 = arith.constant 180 : i32
    %20 = vector.broadcast %c180_i32 : i32 to vector<8x360xi32>
    %21 = arith.cmpi eq, %5, %20 : vector<8x360xi32>
    %cst_4 = arith.constant 0.000000e+00 : f32
    %22 = vector.broadcast %cst_4 : f32 to vector<8x360xf32>
    %23 = arith.select %21, %22, %19 : vector<8x360xi1>, vector<8x360xf32>
    %c8_i32 = arith.constant 8 : i32
    %24 = arith.muli %arg0, %c8_i32 : i32
    %25 = tpu.iota {dimensions = array<i32: 0>} : vector<8x1xi32>
    %26 = vector.broadcast %24 : i32 to vector<8x1xi32>
    %27 = arith.addi %26, %25 : vector<8x1xi32>
    %c8_i32_5 = arith.constant 8 : i32
    %28 = vector.broadcast %c8_i32_5 : i32 to vector<8x1xi32>
    %29 = arith.cmpi slt, %27, %28 : vector<8x1xi32>
    %cst_6 = arith.constant 0.000000e+00 : f32
    %30 = vector.shape_cast %29 : vector<8x1xi1> to vector<8x1xi1>
    %31 = vector.broadcast %30 : vector<8x1xi1> to vector<8x360xi1>
    %32 = vector.broadcast %cst_6 : f32 to vector<8x360xf32>
    %33 = arith.select %31, %23, %32 : vector<8x360xi1>, vector<8x360xf32>
    %34 = vector.shape_cast %33 : vector<8x360xf32> to vector<1x8x360xf32>
    %cst_7 = arith.constant dense<0.000000e+00> : vector<1xf32>
    %35 = vector.multi_reduction <add>, %34, %cst_7 [1, 2] : vector<1x8x360xf32> to vector<1xf32>
    %36 = vector.shape_cast %35 : vector<1xf32> to vector<1x1x1xf32>
    %37 = vector.extract %36[0, 0, 0] : f32 from vector<1x1x1xf32>
    %38 = vector.broadcast %37 : f32 to vector<1x1x1xf32>
    %c0_8 = arith.constant 0 : index
    %c0_9 = arith.constant 0 : index
    %c0_10 = arith.constant 0 : index
    %39 = vector.load %arg3[%c0_8, %c0_9, %c0_10] : memref<1x1x1xf32, #tpu.memory_space<vmem>>, vector<1x1x1xf32>
    tpu.vector_store %arg3[%c0_8, %c0_9, %c0_10], %38 {strides = array<i32>} : memref<1x1x1xf32, #tpu.memory_space<vmem>>, vector<1x1x1xf32>,
    return
  }
  func.func @transform_0(%arg0: i32) -> (i32, i32) {
    %c0_i32 = arith.constant 0 : i32
    %c0_i32_0 = arith.constant 0 : i32
    return %arg0, %c0_i32 : i32, i32
  }
  func.func @transform_1(%arg0: i32) -> (i32, i32) {
    %c0_i32 = arith.constant 0 : i32
    %c0_i32_0 = arith.constant 0 : i32
    return %arg0, %c0_i32 : i32, i32
  }
  func.func @transform_2(%arg0: i32) -> (i32, i32, i32) {
    %c0_i32 = arith.constant 0 : i32
    %c0_i32_0 = arith.constant 0 : i32
    %c0_i32_1 = arith.constant 0 : i32
    return %arg0, %c0_i32, %c0_i32_0 : i32, i32, i32
  }
}

</mosaic_0001>

<llo_original>
// kernel: _loss_pallas.1
$region0: #{_loss_pallas.1}
  #allocation0 [shape = 'u32[]', space=smem, size = 0x4, offset = 0x4, fixed_abs, tag = 'smem constant byte address 0x4 - core index']
  #allocation1 [shape = 'u32[144,128]{1,0:T(1,128)}', space=vmem, size = 0x12000, scoped, tag = 'internal scratch']
  %s0 = inlined_call_operand.hbm [shape: f32[8,360], index: 0, kind: input, shape index: {}]
  %s1 = inlined_call_operand.vmem [shape: s32[8,1], index: 1, kind: input, shape index: {}]
  %s2 = inlined_call_operand.hbm [shape: f32[1,1,1], index: 2, kind: output, shape index: {}]
  %s3 = sld [smem:[#allocation0]]
  $region22: #{_loss_pallas.1} parent=0
    _
  %s5 = ssub.s32 1, %s3
  %s6 = scalar_select 0, %s5, %s3
  $region1: #{_loss_pallas.1} parent=0
    #allocation2 [shape = 'u8[12288]{0}', space=vmem, size = 0x3000, scoped, tag = 'input window, operand 0, single buffered']
    #allocation3 [shape = 's32[1]{0}', space=sflag, size = 0x4, scoped, tag = 'scoped memory for _loss_pallas.1']
    #allocation4 [shape = 's32[1]{0}', space=sflag, size = 0x4, scoped, tag = 'scoped memory for _loss_pallas.1']
    #allocation5 [shape = 'u8[512]{0}', space=vmem, size = 0x400, scoped, tag = 'output window, operand 0, single buffered']
    %7 = vsyncpa [#allocation3], 0
    %8 = vsyncpa [#allocation4], 0
    // Predicated region
    $region2: #{_loss_pallas.1} parent=1 // pred_check
      _
    $region3: #{_loss_pallas.1} parent=1 // pred_check_branch
      %10 = sbr.rel (0) target = $region5
    $region4: #{_loss_pallas.1} parent=1 // pred_region
      %s12 = ssub.s32 384, 384
      %13 = vsyncadd [#allocation3], %s12
      %s15 = sshll.u32 [#allocation2], 4
      %s16 = int_to_ptr.vmem [resolvable:$true] %s15
      %18 = dma.hbm_to_vmem [thread:$0]  %s0, 384, %s16, [#allocation3]
    $region5: #{_loss_pallas.1} parent=1 // pred_fallthru
      _
    // Predicated region
    $region6: #{_loss_pallas.1} parent=1 // pred_check
      _
    $region7: #{_loss_pallas.1} parent=1 // pred_check_branch
      %20 = sbr.rel (0) target = $region9
    $region8: #{_loss_pallas.1} parent=1 // pred_region
      _
    $region9: #{_loss_pallas.1} parent=1 // pred_fallthru
      _
    // Predicated region
    $region10: #{_loss_pallas.1} parent=1 // pred_check
      _
    $region11: #{_loss_pallas.1} parent=1 // pred_check_branch
      %22 = sbr.rel (0) target = $region13
    $region12: #{_loss_pallas.1} parent=1 // pred_region
      %23 = dma.done [#allocation3], 384
    $region13: #{_loss_pallas.1} parent=1 // pred_fallthru
      _
    %v24 = vld [vmem:[#allocation2] sm:$0xff]
    %v25 = vld [vmem:[#allocation2 + $0x8] sm:$0xff]
    %v26 = vld [vmem:[#allocation2 + $0x10] sm:$0xff]
    %v27 = vld [vmem:[%s1] sm:$0xff]
    %v28 = vlaneseq
    %v29 = vand.u32 %v28, 127
    %v30 = vadd.s32 %v29, 128
    %v31 = vadd.s32 %v29, 256
    %32 = vset.pattern.permute.xlu0 0
    %33 = vperm.xlu0 %32, %v27
    %v34 = vpop.permute.xlu0 %33
    %v35 = vsub.s32 %v29, %v34
    %v36 = vsub.s32 %v30, %v34
    %v37 = vsub.s32 %v31, %v34
    %vm38 = vcmp.lt.s32.totalorder %v35, 0
    %v39 = vsub.s32 0, %v35
    %v40 = vsel %vm38, %v39, %v35
    %vm41 = vcmp.lt.s32.totalorder %v36, 0
    %v42 = vsub.s32 0, %v36
    %v43 = vsel %vm41, %v42, %v36
    %vm44 = vcmp.lt.s32.totalorder %v37, 0
    %v45 = vsub.s32 0, %v37
    %v46 = vsel %vm44, %v45, %v37
    %v47 = vsub.s32 360, %v40
    %v48 = vsub.s32 360, %v43
    %v49 = vsub.s32 360, %v46
    %vm50 = vcmp.lt.s32.totalorder %v40, %v47
    %v51 = vsel %vm50, %v40, %v47
    %vm52 = vcmp.lt.s32.totalorder %v43, %v48
    %v53 = vsel %vm52, %v43, %v48
    %vm54 = vcmp.lt.s32.totalorder %v46, %v49
    %v55 = vsel %vm54, %v46, %v49
    %v56 = vcvt.s32.f32 %v51
    %v57 = vcvt.s32.f32 %v53
    %v58 = vcvt.s32.f32 %v55
    %v59 = vmul.f32 %v56, -0.020202707
    %v60 = vmul.f32 %v57, -0.020202707
    %v61 = vmul.f32 %v58, -0.020202707
    %v62 = vmul.f32 %v59, 1.442695
    %v63 = vpow.pop %v62
    %v64 = vmul.f32 %v60, 1.442695
    %v65 = vpow.pop %v64
    %v66 = vmul.f32 %v61, 1.442695
    %v67 = vpow.pop %v66
    %v68 = vsub.f32 %v63, %v24
    %v69 = vsub.f32 %v65, %v25
    %v70 = vsub.f32 %v67, %v26
    %v71 = vand.u32 2147483647, %v68
    %v72 = vand.u32 2147483647, %v69
    %v73 = vand.u32 2147483647, %v70
    %vm74 = vcmp.eq.s32.totalorder %v40, 0
    %vm75 = vcmp.eq.s32.totalorder %v43, 0
    %vm76 = vcmp.eq.s32.totalorder %v46, 0
    %v77 = vsub.f32 1.0, %v24
    %v78 = vsub.f32 1.0, %v25
    %v79 = vsub.f32 1.0, %v26
    %v80 = vsel %vm74, %v77, %v71
    %v81 = vsel %vm75, %v78, %v72
    %v82 = vsel %vm76, %v79, %v73
    %vm83 = vcmp.eq.s32.totalorder %v40, 180
    %vm84 = vcmp.eq.s32.totalorder %v43, 180
    %vm85 = vcmp.eq.s32.totalorder %v46, 180
    %v86 = vsel %vm83, 0.0, %v80
    %v87 = vsel %vm84, 0.0, %v81
    %v88 = vsel %vm85, 0.0, %v82
    %s89 = smul.u32 0, 8
    %v90 = vlaneseq
    %v91 = vshrl.u32 %v90, 7
    %v92 = vstv %s89
    %v93 = vadd.s32 %v92, %v91
    %vm94 = vcmp.lt.s32.totalorder %v93, 8
    %v95 = vsel %vm94, 1, 0
    %vm96 = vcmp.eq.s32.totalorder %v95, 1
    %v97 = vsel %vm96, %v86, 0.0
    %v98 = vsel %vm96, %v87, 0.0
    %v99 = vsel %vm96, %v88, 0.0
    %v100 = vadd.f32 %v97, %v98
    %vm101 = vcmask 850944
    %v102 = vsel %vm101, %v99, 0.0
    %v103 = vadd.f32 %v100, %v102
    %104 = vadd.xlane.f32.xlu0 %v103
    %v105 = vpop.xlane.xlu0 %104
    %v106 = vrot.slane %v105, 4
    %v107 = vadd.f32 %v105, %v106
    %v108 = vrot.slane %v107, 2
    %v109 = vadd.f32 %v107, %v108
    %v110 = vrot.slane %v109, 1
    %v111 = vadd.f32 %v109, %v110
    %s112 = vtos %v111
    %v113 = vstv %s112
    %vm114 = vcmask 0
    %115 = vst.msk [vmem:[#allocation5] sm:$0x1] %vm114, %v113
    // Predicated region
    $region14: #{_loss_pallas.1} parent=1 // pred_check
      _
    $region15: #{_loss_pallas.1} parent=1 // pred_check_branch
      %117 = sbr.rel (0) target = $region17
    $region16: #{_loss_pallas.1} parent=1 // pred_region
      %s119 = ssub.s32 16, 16
      %120 = vsyncadd [#allocation4], %s119
      %s122 = sshll.u32 [#allocation5], 4
      %s123 = int_to_ptr.vmem [resolvable:$true] %s122
      %125 = dma.vmem_to_hbm [thread:$0]  %s123, 16, %s2, [#allocation4]
    $region17: #{_loss_pallas.1} parent=1 // pred_fallthru
      _
    // Predicated region
    $region18: #{_loss_pallas.1} parent=1 // pred_check
      _
    $region19: #{_loss_pallas.1} parent=1 // pred_check_branch
      %127 = sbr.rel (0) target = $region21
    $region20: #{_loss_pallas.1} parent=1 // pred_region
      %128 = dma.done [#allocation4], 16
    $region21: #{_loss_pallas.1} parent=1 // pred_fallthru
      _
    %129 = vsyncpa [#allocation3], 1
    %130 = vsyncpa [#allocation4], 1

</llo_original>
